<compile_context>
chip_gen: v7x
topology: tpu7x:2x2x1
jax: 0.10.0
libtpu: 0.0.40
codegen_flags: <defaults>
</compile_context>

<pallas_src>
import numpy as np
import jax
import jax.numpy as jnp
from jax import lax
from jax.experimental import pallas as pl
from jax.experimental.pallas import tpu as pltpu

OUT_H, OUT_W = 256, 256


def _bilinear_matrix(in_size: int, out_size: int) -> np.ndarray:
    """PyTorch align_corners=False bilinear interpolation as a dense matrix."""
    scale = in_size / out_size
    src = (np.arange(out_size, dtype=np.float64) + 0.5) * scale - 0.5
    src = np.clip(src, 0.0, in_size - 1)
    i0 = np.floor(src).astype(np.int64)
    i1 = np.minimum(i0 + 1, in_size - 1)
    frac = (src - i0).astype(np.float32)
    A = np.zeros((out_size, in_size), dtype=np.float32)
    A[np.arange(out_size), i0] += 1.0 - frac
    A[np.arange(out_size), i1] += frac
    return A


def _make_kernel(tb, C, H, W, rows_per_img, reduce_channels, compute_dtype):
    CH = C * H

    def kernel(scal_ref, x_ref, left_ref, awt_ref, o_ref, t_ref):
        # scal_ref: SMEM (1 + C,) f32      [conv bias, w_0 .. w_{C-1}]
        # x_ref:    VMEM (tb, C*H, W)      batch tile, native dtype
        # left_ref: VMEM (256, rows_per_img)   kron(w, A_h)  or  A_h
        # awt_ref:  VMEM (W, 256)          column-interp matrix, transposed
        # o_ref:    VMEM (tb, 1, 256, 256)
        # t_ref:    VMEM scratch (tb * rows_per_img, 256)
        awt = awt_ref[...]

        if reduce_channels:
            # VPU channel reduce (large C*H path): depth = sum_c w_c * x[:, c]
            # (static loop over C; weights read as SMEM scalars)
            acc = x_ref[:, 0:H, :].astype(jnp.float32) * scal_ref[1]
            for c in range(1, C):
                acc = acc + x_ref[:, c * H:(c + 1) * H, :].astype(jnp.float32) * scal_ref[1 + c]
            rows = acc.reshape(tb * H, W).astype(compute_dtype)
        else:
            # channel reduction folded into the MXU via kron(w, A_h)
            rows = x_ref[...].reshape(tb * CH, W).astype(compute_dtype)

        # One batched MXU matmul for the whole tile: contract W first -> lane-dense
        # (tb*rows_per_img, 256) intermediate, streamed to VMEM scratch.
        t_ref[...] = jnp.dot(rows, awt,
                             preferred_element_type=jnp.float32).astype(t_ref.dtype)

        bias = scal_ref[0]
        left = left_ref[...]

        def body(b, carry):
            start = pl.multiple_of(b * rows_per_img, rows_per_img)
            t_b = t_ref[pl.ds(start, rows_per_img), :]
            out = jnp.dot(left, t_b, preferred_element_type=jnp.float32) + bias
            o_ref[b, 0] = out.astype(o_ref.dtype)
            return carry

        # fori_loop (not an unrolled Python loop) bounds live ranges: each full
        # 256x256 result (= the whole vreg file in f32) is stored before the next.
        lax.fori_loop(0, tb, body, 0)

    return kernel


def depth_wrapper_forward(x, conv_w, conv_b, *, compute_dtype=jnp.float32,
                          out_dtype=jnp.float32, channel_reduce_threshold=2048):
    """x: (N, C, H, W) -> (N, 1, 256, 256)."""
    N, C, H, W = x.shape
    CH = C * H
    compute_dtype = np.dtype(compute_dtype)
    out_dtype = np.dtype(out_dtype)

    # For large C*H the dense kron(w, A_h) matrix would inflate MXU work and VMEM;
    # switch to an in-kernel VPU channel reduce followed by the small interp matmuls.
    reduce_channels = CH > channel_reduce_threshold
    rows_per_img = H if reduce_channels else CH

    a_h = jnp.asarray(_bilinear_matrix(H, OUT_H))                  # (256, H) f32
    awt = jnp.asarray(_bilinear_matrix(W, OUT_W).T)                # (W, 256) f32
    w = conv_w.reshape(C).astype(jnp.float32)
    if reduce_channels:
        left = a_h
    else:
        # left[:, c*H + h] = w_c * A_h[:, h]   (== kron(w, A_h))
        left = jnp.einsum("c,oh->och", w, a_h).reshape(OUT_H, CH)
    left = left.astype(compute_dtype)
    awt = awt.astype(compute_dtype)
    scal = jnp.concatenate([conv_b.reshape(1).astype(jnp.float32), w])   # (1+C,)

    # Wrapper-side reshape is free/contiguous; enables one batched first matmul.
    x2d = x.reshape(N, CH, W)

    in_itemsize = np.dtype(x.dtype).itemsize
    cd_itemsize = compute_dtype.itemsize
    out_itemsize = out_dtype.itemsize

    # ---- VMEM-budget-aware batch tile (accounts for double buffering) ----
    try:
        vmem_cap = int(pltpu.get_tpu_info().vmem_capacity_bytes)
    except Exception:
        vmem_cap = 64 * 1024 * 1024        # v7x per-TC capacity: safe lower bound
    budget = vmem_cap // 2                 # leave headroom for compiler internals
    const_bytes = 2 * (OUT_H * rows_per_img + W * OUT_W) * cd_itemsize   # 2x-buffered
    per_img = (2 * CH * W * in_itemsize                 # input tile (double-buffered)
               + 2 * OUT_H * OUT_W * out_itemsize       # output tile (double-buffered)
               + rows_per_img * OUT_W * cd_itemsize)    # scratch (single)

    def fits(t):
        return const_bytes + t * per_img <= int(0.8 * budget)

    # Prefer >=4 grid steps (>=2 per v7x TensorCore) so DMA/compute overlap survives.
    min_steps = 4 if N >= 4 else (2 if N >= 2 else 1)
    divisors = [d for d in range(1, min(16, N) + 1) if N % d == 0]
    fitting = [d for d in divisors if fits(d)] or [1]
    preferred = [d for d in fitting if N // d >= min_steps]
    tb = max(preferred) if preferred else max(fitting)
    grid = (N // tb,)

    if reduce_channels:
        flops_per_img = 2 * C * H * W + 2 * H * W * OUT_W + 2 * OUT_H * H * OUT_W
    else:
        flops_per_img = 2 * CH * W * OUT_W + 2 * OUT_H * CH * OUT_W
    cost = pl.CostEstimate(
        flops=int(N * flops_per_img),
        transcendentals=0,
        bytes_accessed=int(N * (CH * W * in_itemsize + OUT_H * OUT_W * out_itemsize)
                           + (OUT_H * rows_per_img + W * OUT_W) * cd_itemsize),
    )

    kernel = _make_kernel(tb, C, H, W, rows_per_img, reduce_channels, compute_dtype)

    return pl.pallas_call(
        kernel,
        out_shape=jax.ShapeDtypeStruct((N, 1, OUT_H, OUT_W), out_dtype),
        grid_spec=pltpu.PrefetchScalarGridSpec(
            num_scalar_prefetch=0,
            grid=grid,
            in_specs=[
                pl.BlockSpec(memory_space=pltpu.MemorySpace.SMEM),     # [bias, w]
                pl.BlockSpec((tb, CH, W), lambda n: (n, 0, 0)),        # x batch tile
                pl.BlockSpec((OUT_H, rows_per_img), lambda n: (0, 0)),  # left matrix
                pl.BlockSpec((W, OUT_W), lambda n: (0, 0)),            # A_w^T
            ],
            out_specs=pl.BlockSpec((tb, 1, OUT_H, OUT_W), lambda n: (n, 0, 0, 0)),
            scratch_shapes=[pltpu.VMEM((tb * rows_per_img, OUT_W), compute_dtype)],
        ),
        compiler_params=pltpu.CompilerParams(
            dimension_semantics=("parallel",),
            vmem_limit_bytes=int(budget),
        ),
        cost_estimate=cost,
    )(scal, x2d, left, awt)


def _reference(x, conv_w, conv_b):
    """Pure-JAX reference with identical interpolation semantics."""
    N, C, H, W = x.shape
    a_h = jnp.asarray(_bilinear_matrix(H, OUT_H))
    a_w = jnp.asarray(_bilinear_matrix(W, OUT_W))
    depth = jnp.einsum("c,nchw->nhw", conv_w.reshape(C).astype(jnp.float32),
                       x.astype(jnp.float32)) + conv_b.reshape(())
    return jnp.einsum("oh,nhw,pw->nop", a_h, depth, a_w)[:, None, :, :]


if __name__ == "__main__":
    key = jax.random.PRNGKey(0)
    kx, kw, kb = jax.random.split(key, 3)

    N, C, H, W = 2, 4, 16, 16
    x = jax.random.normal(kx, (N, C, H, W), dtype=jnp.float32)
    conv_w = jax.random.normal(kw, (1, C, 1, 1), dtype=jnp.float32) * 0.5
    conv_b = jax.random.normal(kb, (1,), dtype=jnp.float32) * 0.1

    ref = jax.block_until_ready(_reference(x, conv_w, conv_b))

    # 1) default path: channel reduction fused into the MXU via kron(w, A_h)
    out = jax.block_until_ready(depth_wrapper_forward(x, conv_w, conv_b))
    assert out.shape == (N, 1, OUT_H, OUT_W), out.shape
    np.testing.assert_allclose(np.asarray(out), np.asarray(ref), rtol=1e-5, atol=1e-5)

    # 2) VPU channel-reduce path (auto-selected for large C*H); force it here
    out_r = jax.block_until_ready(
        depth_wrapper_forward(x, conv_w, conv_b, channel_reduce_threshold=0))
    np.testing.assert_allclose(np.asarray(out_r), np.asarray(ref), rtol=1e-5, atol=1e-5)

    # 3) larger batch: exercises batch tile > 1 and the in-kernel fori_loop
    N2 = 32
    x2 = jax.random.normal(kx, (N2, C, H, W), dtype=jnp.float32)
    out2 = jax.block_until_ready(depth_wrapper_forward(x2, conv_w, conv_b))
    ref2 = jax.block_until_ready(_reference(x2, conv_w, conv_b))
    np.testing.assert_allclose(np.asarray(out2), np.asarray(ref2), rtol=1e-5, atol=1e-5)

    print("KERNEL_OK")
</pallas_src>

<mosaic_0001>
module attributes {stable_mosaic.version = 11 : i64} {
  func.func @kernel(%arg0: i32, %arg1: memref<5xf32, #tpu.memory_space<smem>>, %arg2: memref<1x64x16xf32, #tpu.memory_space<vmem>>, %arg3: memref<256x64xf32, #tpu.memory_space<vmem>>, %arg4: memref<16x256xf32, #tpu.memory_space<vmem>>, %arg5: memref<1x1x256x256xf32, #tpu.memory_space<vmem>>, %arg6: memref<64x256xf32, #tpu.memory_space<vmem>>) attributes {dimension_semantics = [#tpu.dimension_semantics<parallel>], iteration_bounds = array<i64: 2>, scalar_prefetch = 0 : i64, scratch_operands = 1 : i64, tpu.core_type = #tpu.core_type<tc>, window_params = [{transform_indices = @transform_0, window_bounds = array<i64: 5>}, {transform_indices = @transform_1, window_bounds = array<i64: 1, 64, 16>}, {pipeline_mode = #tpu.pipeline_mode<synchronous>, transform_indices = @transform_2, window_bounds = array<i64: 256, 64>}, {pipeline_mode = #tpu.pipeline_mode<synchronous>, transform_indices = @transform_3, window_bounds = array<i64: 16, 256>}, {transform_indices = @transform_4, window_bounds = array<i64: 1, 1, 256, 256>}]} {
    %c0 = arith.constant 0 : index
    %c0_0 = arith.constant 0 : index
    %0 = vector.load %arg4[%c0, %c0_0] : memref<16x256xf32, #tpu.memory_space<vmem>>, vector<16x256xf32>
    %c0_1 = arith.constant 0 : index
    %c0_2 = arith.constant 0 : index
    %c0_3 = arith.constant 0 : index
    %1 = vector.load %arg2[%c0_1, %c0_2, %c0_3] : memref<1x64x16xf32, #tpu.memory_space<vmem>>, vector<1x64x16xf32>
    %2 = vector.shape_cast %1 : vector<1x64x16xf32> to vector<64x16xf32>
    %cst = arith.constant dense<0.000000e+00> : vector<64x256xf32>
    %3 = tpu.matmul %2, %0, %cst {dimension_numbers = #tpu.dot_dimension_numbers<[1], [0], [0], [1], [0, 0, 1, 1], [], []>} : vector<64x16xf32>, vector<16x256xf32>, vector<64x256xf32> -> vector<64x256xf32>
    %c0_4 = arith.constant 0 : index
    %c0_5 = arith.constant 0 : index
    %4 = vector.load %arg6[%c0_4, %c0_5] : memref<64x256xf32, #tpu.memory_space<vmem>>, vector<64x256xf32>
    tpu.vector_store %arg6[%c0_4, %c0_5], %3 {strides = array<i32>} : memref<64x256xf32, #tpu.memory_space<vmem>>, vector<64x256xf32>,
    %c0_6 = arith.constant 0 : index
    %5 = memref.load %arg1[%c0_6] : memref<5xf32, #tpu.memory_space<smem>>
    %c0_7 = arith.constant 0 : index
    %c0_8 = arith.constant 0 : index
    %6 = vector.load %arg3[%c0_7, %c0_8] : memref<256x64xf32, #tpu.memory_space<vmem>>, vector<256x64xf32>
    %c0_i32 = arith.constant 0 : i32
    %c64_i32 = arith.constant 64 : i32
    %7 = arith.muli %c0_i32, %c64_i32 : i32
    %8 = tpu.assume_multiple %7, 64 : i32
    %9 = arith.index_cast %8 : i32 to index
    %c0_9 = arith.constant 0 : index
    %10 = vector.load %arg6[%9, %c0_9] : memref<64x256xf32, #tpu.memory_space<vmem>>, vector<64x256xf32>
    %cst_10 = arith.constant dense<0.000000e+00> : vector<256x256xf32>
    %11 = tpu.matmul %6, %10, %cst_10 {dimension_numbers = #tpu.dot_dimension_numbers<[1], [0], [0], [1], [0, 0, 1, 1], [], []>} : vector<256x64xf32>, vector<64x256xf32>, vector<256x256xf32> -> vector<256x256xf32>
    %12 = vector.broadcast %5 : f32 to vector<256x256xf32>
    %13 = arith.addf %11, %12 : vector<256x256xf32>
    %14 = arith.index_cast %c0_i32 : i32 to index
    %c0_11 = arith.constant 0 : index
    %c0_12 = arith.constant 0 : index
    %c0_13 = arith.constant 0 : index
    %15 = vector.load %arg5[%14, %c0_11, %c0_12, %c0_13] : memref<1x1x256x256xf32, #tpu.memory_space<vmem>>, vector<1x1x256x256xf32>
    %16 = vector.shape_cast %15 : vector<1x1x256x256xf32> to vector<256x256xf32>
    %17 = vector.shape_cast %13 : vector<256x256xf32> to vector<1x1x256x256xf32>
    tpu.vector_store %arg5[%14, %c0_11, %c0_12, %c0_13], %17 {strides = array<i32>} : memref<1x1x256x256xf32, #tpu.memory_space<vmem>>, vector<1x1x256x256xf32>,
    %c1_i32 = arith.constant 1 : i32
    return
  }
  func.func @transform_0(%arg0: i32) -> i32 {
    %c0_i32 = arith.constant 0 : i32
    %c0_i32_0 = arith.constant 0 : i32
    return %c0_i32 : i32
  }
  func.func @transform_1(%arg0: i32) -> (i32, i32, i32) {
    %c0_i32 = arith.constant 0 : i32
    %c0_i32_0 = arith.constant 0 : i32
    %c0_i32_1 = arith.constant 0 : i32
    return %arg0, %c0_i32, %c0_i32_0 : i32, i32, i32
  }
  func.func @transform_2(%arg0: i32) -> (i32, i32) {
    %c0_i32 = arith.constant 0 : i32
    %c0_i32_0 = arith.constant 0 : i32
    %c0_i32_1 = arith.constant 0 : i32
    return %c0_i32, %c0_i32_0 : i32, i32
  }
  func.func @transform_3(%arg0: i32) -> (i32, i32) {
    %c0_i32 = arith.constant 0 : i32
    %c0_i32_0 = arith.constant 0 : i32
    %c0_i32_1 = arith.constant 0 : i32
    return %c0_i32, %c0_i32_0 : i32, i32
  }
  func.func @transform_4(%arg0: i32) -> (i32, i32, i32, i32) {
    %c0_i32 = arith.constant 0 : i32
    %c0_i32_0 = arith.constant 0 : i32
    %c0_i32_1 = arith.constant 0 : i32
    %c0_i32_2 = arith.constant 0 : i32
    return %arg0, %c0_i32, %c0_i32_0, %c0_i32_1 : i32, i32, i32, i32
  }
}

</mosaic_0001>

<llo_original>
// kernel: tpu_custom_call.1
$region0: #{tpu_custom_call.1}
  #allocation0 [shape = 'u32[]', space=smem, size = 0x4, offset = 0x4, fixed_abs, tag = 'smem constant byte address 0x4 - core index']
  #allocation1 [shape = 'u32[144,128]{1,0:T(1,128)}', space=vmem, size = 0x12000, scoped, tag = 'internal scratch']
  #allocation2 [shape = 'f32[64,256]{1,0:T(8,128)}', space=vmem, size = 0x10000, scoped, tag = 'scratch operand']
  %s0 = inlined_call_operand.vmem [shape: f32[5], index: 0, kind: input, shape index: {}]
  %s1 = inlined_call_operand.vmem [shape: f32[2,64,16], index: 1, kind: input, shape index: {}]
  %s2 = inlined_call_operand.vmem [shape: f32[256,64], index: 2, kind: input, shape index: {}]
  %s3 = inlined_call_operand.vmem [shape: f32[16,256], index: 3, kind: input, shape index: {}]
  %s4 = inlined_call_operand.hbm [shape: f32[2,1,256,256], index: 4, kind: output, shape index: {}]
  %s5 = sld [smem:[#allocation0]]
  $region53: #{tpu_custom_call.1} parent=0
    _
  %s7 = ssub.s32 1, %s5
  %s8 = scalar_select 0, %s7, %s5
  $region1: #{tpu_custom_call.1} parent=0
    #allocation3 [shape = 'u8[512]{0}', space=smem, size = 0x200, scoped, tag = 'input window, operand 0, single buffered']
    #allocation4 [shape = 's32[2]{0}', space=sflag, size = 0x8, scoped, tag = 'scoped memory for tpu_custom_call.1']
    #allocation5 [shape = 's32[2]{0}', space=sflag, size = 0x8, scoped, tag = 'scoped memory for tpu_custom_call.1']
    #allocation6 [shape = 'u8[524288]{0}', space=vmem, size = 0x80000, scoped, tag = 'output window, operand 0']
    %9 = vsyncpa [#allocation5], 0
    %10 = vsyncpa [#allocation4], 0
    %s11 = scalar_lea.sflag [#allocation4], 1
    %12 = vsyncpa %s11, 0
    loop: start=0, step=1, limit=4
    $region2: #{tpu_custom_call.1} parent=1 // loop_pre_header
      _
    $region3: #{tpu_custom_call.1} parent=1 // loop_header
      %s14 = sphi 0, %s18
      %p15 = scmp.ge.s32.totalorder %s14, 4
      %s22 = sphi 0, %s22
      %s24 = sphi 0, %s22
      %s25 = sphi 0, %s24
      %s39 = sphi 0, %s25
      %s45 = sphi 0, %s47
      %s48 = sphi 0, %s45
      %s49 = sphi 0, %s48
      %s65 = sphi 0, %s49
      %s69 = sphi 0, %s69
      %s71 = sphi 0, %s69
      %s72 = sphi 0, %s71
      %s86 = sphi 0, %s72
      %s90 = sphi 0, %s90
      %s92 = sphi 0, %s90
      %s93 = sphi 0, %s92
      %s107 = sphi 0, %s93
      %s113 = sphi 0, %s115
      %s116 = sphi 0, %s113
      %s117 = sphi 0, %s116
      %s133 = sphi 0, %s117
    $region4: #{tpu_custom_call.1} parent=1 // loop_header_branch
      %17 = sbr.rel (%p15) target = $region8
    $region5: #{tpu_custom_call.1} parent=1 // loop_body
      %s19 = ssub.s32 %s14, 1
      %s20 = ssub.s32 %s14, 2
      %s21 = sadd.s32 %s14, 1
      %s23 = sadd.s32 %s22, 1
      %p26 = scmp.eq.s32.totalorder %s14, 1
      %p27 = scmp.ne.s32.totalorder %s22, %s24
      %p28 = scmp.eq.s32.totalorder %s14, 0
      %p29 = por %p27, %p28
      %p30 = scmp.ne.s32.totalorder %s22, %s24
      %p31 = scmp.eq.s32.totalorder %s19, 1
      %p32 = por %p30, %p31
      %p33 = scmp.ne.s32.totalorder %s24, %s25
      %p34 = scmp.eq.s32.totalorder %s19, 0
      %p35 = por %p33, %p34
      %p36 = scmp.ne.s32.totalorder %s24, %s25
      %p37 = scmp.eq.s32.totalorder %s20, 1
      %p38 = por %p36, %p37
      %p40 = scmp.ne.s32.totalorder %s25, %s39
      %p41 = scmp.eq.s32.totalorder %s20, 0
      %p42 = por %p40, %p41
      %s43 = ssub.s32 %s14, %s21
      %p44 = scmp.eq.s32.totalorder %s43, 0
      %s46 = sadd.s32 %s45, 1
      %s47 = scalar_select %p44, %s45, %s46
      %p50 = pneg %p44
      %p51 = scmp.eq.s32.totalorder %s14, 1
      %p52 = por %p50, %p51
      %p53 = scmp.ne.s32.totalorder %s45, %s48
      %p54 = scmp.eq.s32.totalorder %s14, 0
      %p55 = por %p53, %p54
      %p56 = scmp.ne.s32.totalorder %s45, %s48
      %p57 = scmp.eq.s32.totalorder %s19, 1
      %p58 = por %p56, %p57
      %p59 = scmp.ne.s32.totalorder %s48, %s49
      %p60 = scmp.eq.s32.totalorder %s19, 0
      %p61 = por %p59, %p60
      %p62 = scmp.ne.s32.totalorder %s48, %s49
      %p63 = scmp.eq.s32.totalorder %s20, 1
      %p64 = por %p62, %p63
      %p66 = scmp.ne.s32.totalorder %s49, %s65
      %p67 = scmp.eq.s32.totalorder %s20, 0
      %p68 = por %p66, %p67
      %s70 = sadd.s32 %s69, 1
      %p73 = scmp.eq.s32.totalorder %s14, 1
      %p74 = scmp.ne.s32.totalorder %s69, %s71
      %p75 = scmp.eq.s32.totalorder %s14, 0
      %p76 = por %p74, %p75
      %p77 = scmp.ne.s32.totalorder %s69, %s71
      %p78 = scmp.eq.s32.totalorder %s19, 1
      %p79 = por %p77, %p78
      %p80 = scmp.ne.s32.totalorder %s71, %s72
      %p81 = scmp.eq.s32.totalorder %s19, 0
      %p82 = por %p80, %p81
      %p83 = scmp.ne.s32.totalorder %s71, %s72
      %p84 = scmp.eq.s32.totalorder %s20, 1
      %p85 = por %p83, %p84
      %p87 = scmp.ne.s32.totalorder %s72, %s86
      %p88 = scmp.eq.s32.totalorder %s20, 0
      %p89 = por %p87, %p88
      %s91 = sadd.s32 %s90, 1
      %p94 = scmp.eq.s32.totalorder %s14, 1
      %p95 = scmp.ne.s32.totalorder %s90, %s92
      %p96 = scmp.eq.s32.totalorder %s14, 0
      %p97 = por %p95, %p96
      %p98 = scmp.ne.s32.totalorder %s90, %s92
      %p99 = scmp.eq.s32.totalorder %s19, 1
      %p100 = por %p98, %p99
      %p101 = scmp.ne.s32.totalorder %s92, %s93
      %p102 = scmp.eq.s32.totalorder %s19, 0
      %p103 = por %p101, %p102
      %p104 = scmp.ne.s32.totalorder %s92, %s93
      %p105 = scmp.eq.s32.totalorder %s20, 1
      %p106 = por %p104, %p105
      %p108 = scmp.ne.s32.totalorder %s93, %s107
      %p109 = scmp.eq.s32.totalorder %s20, 0
      %p110 = por %p108, %p109
      %s111 = ssub.s32 %s14, %s21
      %p112 = scmp.eq.s32.totalorder %s111, 0
      %s114 = sadd.s32 %s113, 1
      %s115 = scalar_select %p112, %s113, %s114
      %p118 = pneg %p112
      %p119 = scmp.eq.s32.totalorder %s14, 1
      %p120 = por %p118, %p119
      %p121 = scmp.ne.s32.totalorder %s113, %s116
      %p122 = scmp.eq.s32.totalorder %s14, 0
      %p123 = por %p121, %p122
      %p124 = scmp.ne.s32.totalorder %s113, %s116
      %p125 = scmp.eq.s32.totalorder %s19, 1
      %p126 = por %p124, %p125
      %p127 = scmp.ne.s32.totalorder %s116, %s117
      %p128 = scmp.eq.s32.totalorder %s19, 0
      %p129 = por %p127, %p128
      %p130 = scmp.ne.s32.totalorder %s116, %s117
      %p131 = scmp.eq.s32.totalorder %s20, 1
      %p132 = por %p130, %p131
      %p134 = scmp.ne.s32.totalorder %s117, %s133
      %p135 = scmp.eq.s32.totalorder %s20, 0
      %p136 = por %p134, %p135
      %p137 = scmp.le.s32.totalorder 1, %s14
      %p138 = scmp.lt.s32.totalorder %s14, 3
      %p139 = pnand %p137, %p138
      %p140 = pneg %p139
      // Predicated region
      $region9: #{tpu_custom_call.1} parent=5 // pred_check
        _
      $region10: #{tpu_custom_call.1} parent=5 // pred_check_branch
        %142 = sbr.rel (%p139) target = $region12
      $region11: #{tpu_custom_call.1} parent=5 // pred_region
        %s143 = ssub.s32 %s14, 1
        // Predicated region
        $region13: #{tpu_custom_call.1} parent=11 // pred_check
          %p144 = pneg %p35
        $region14: #{tpu_custom_call.1} parent=11 // pred_check_branch
          %146 = sbr.rel (%p144) target = $region16
        $region15: #{tpu_custom_call.1} parent=11 // pred_region
          %s148 = ssub.s32 16, 16
          %149 = vsyncadd [#allocation5], %s148
          %s151 = sshll.u32 %s0, 4
          %s152 = int_to_ptr.vmem [resolvable:$true] %s151
          %154 = dma.vmem_to_smem %s152, 16, [#allocation3], [#allocation5]
        $region16: #{tpu_custom_call.1} parent=11 // pred_fallthru
          _
        // Predicated region
        $region17: #{tpu_custom_call.1} parent=11 // pred_check
          %p155 = pneg %p82
        $region18: #{tpu_custom_call.1} parent=11 // pred_check_branch
          %157 = sbr.rel (%p155) target = $region20
        $region19: #{tpu_custom_call.1} parent=11 // pred_region
          _
        $region20: #{tpu_custom_call.1} parent=11 // pred_fallthru
          _
        // Predicated region
        $region21: #{tpu_custom_call.1} parent=11 // pred_check
          %p158 = pneg %p103
        $region22: #{tpu_custom_call.1} parent=11 // pred_check_branch
          %160 = sbr.rel (%p158) target = $region24
        $region23: #{tpu_custom_call.1} parent=11 // pred_region
          _
        $region24: #{tpu_custom_call.1} parent=11 // pred_fallthru
          _
      $region12: #{tpu_custom_call.1} parent=5 // pred_fallthru
        _
      %p161 = scmp.lt.s32.totalorder %s14, 2
      // Predicated region
      $region25: #{tpu_custom_call.1} parent=5 // pred_check
        %p162 = pneg %p161
      $region26: #{tpu_custom_call.1} parent=5 // pred_check_branch
        %164 = sbr.rel (%p162) target = $region28
      $region27: #{tpu_custom_call.1} parent=5 // pred_region
        // Predicated region
        $region29: #{tpu_custom_call.1} parent=27 // pred_check
          %p165 = pneg %p55
        $region30: #{tpu_custom_call.1} parent=27 // pred_check_branch
          %167 = sbr.rel (%p165) target = $region32
        $region31: #{tpu_custom_call.1} parent=27 // pred_region
          %p168 = scmp.lt.s32.totalorder %s14, 1
          %s169 = scalar_select %p168, %s14, 1
          %s170 = smul.addr %s169, 8
          %s171 = smul.addr %s170, 8
          %s172 = scalar_lea.vmem %s1, %s171
        $region32: #{tpu_custom_call.1} parent=27 // pred_fallthru
          _
      $region28: #{tpu_custom_call.1} parent=5 // pred_fallthru
        _
      %p173 = scmp.le.s32.totalorder 1, %s14
      %p174 = scmp.lt.s32.totalorder %s14, 3
      %p175 = pnand %p173, %p174
      %p176 = pneg %p175
      // Predicated region
      $region33: #{tpu_custom_call.1} parent=5 // pred_check
        _
      $region34: #{tpu_custom_call.1} parent=5 // pred_check_branch
        %178 = sbr.rel (%p175) target = $region36
      $region35: #{tpu_custom_call.1} parent=5 // pred_region
        %s179 = ssub.s32 %s14, 1
        // Predicated region
        $region37: #{tpu_custom_call.1} parent=35 // pred_check
          %p180 = pneg %p35
        $region38: #{tpu_custom_call.1} parent=35 // pred_check_branch
          %182 = sbr.rel (%p180) target = $region40
        $region39: #{tpu_custom_call.1} parent=35 // pred_region
          %183 = dma.done [#allocation5], 16
        $region40: #{tpu_custom_call.1} parent=35 // pred_fallthru
          _
        %184 = sfence
        %p185 = pneg %p35
        %p186 = pneg %p32
        %p187 = scmp.lt.s32.totalorder %s19, 1
        %s188 = scalar_select %p187, %s19, 1
        %s189 = smul.addr %s188, 8
        %s190 = smul.addr %s189, 8
        %s191 = scalar_lea.vmem %s1, %s190
        %p192 = pneg %p61
        %p193 = pneg %p58
        %p194 = pneg %p82
        %p195 = pneg %p79
        %p196 = pneg %p103
        %p197 = pneg %p100
        %p198 = pneg %p129
        %p199 = pneg %p126
        %s200 = sand.u32 %s116, 1
        %s201 = scalar_lea.sflag [#allocation4], %s200
        %s202 = sand.u32 %s116, 1
        %s203 = smul.addr %s202, 512
        %s204 = scalar_lea.vmem [#allocation6], %s203
        %p205 = scmp.lt.s32.totalorder %s19, 1
        %s206 = scalar_select %p205, %s19, 1
        %s207 = smul.addr %s206, 8
        %s208 = smul.addr %s207, 8
        %s209 = scalar_lea.vmem %s1, %s208
        %v210 = vld [vmem:[%s3] sm:$0xff]
        %v211 = vld [vmem:[%s3 + $0x8] sm:$0xff]
        %v212 = vld [vmem:[%s3 + $0x10] sm:$0xff]
        %v213 = vld [vmem:[%s3 + $0x18] sm:$0xff]
        %v214 = vld [vmem:[%s209] sm:$0xff]
        %v215 = vld [vmem:[%s209 + $0x8] sm:$0xff]
        %v216 = vld [vmem:[%s209 + $0x10] sm:$0xff]
        %v217 = vld [vmem:[%s209 + $0x18] sm:$0xff]
        %v218 = vld [vmem:[%s209 + $0x20] sm:$0xff]
        %v219 = vld [vmem:[%s209 + $0x28] sm:$0xff]
        %v220 = vld [vmem:[%s209 + $0x30] sm:$0xff]
        %v221 = vld [vmem:[%s209 + $0x38] sm:$0xff]
        %vm222 = vcmask 130048
        %v224 = vsel %vm222, %v214, 0
        %v227 = vsel %vm222, %v215, 0
        %v230 = vsel %vm222, %v216, 0
        %v233 = vsel %vm222, %v217, 0
        %v236 = vsel %vm222, %v218, 0
        %v239 = vsel %vm222, %v219, 0
        %v242 = vsel %vm222, %v220, 0
        %v245 = vsel %vm222, %v221, 0
        %247 = vmatprep.subr.mxu0 %v211
        %248 = vmatpush1.msra.mxu0 %v210
        %249 = vmatprep.subr.mxu0 %v213
        %250 = vmatpush1.msra.mxu0 %v212
        %251 = vmatprep.subr.mxu0 0.0
        %252 = vmatpush1.msra.mxu0 0.0
        %253 = vmatprep.subr.mxu0 0.0
        %254 = vmatpush1.msra.mxu0 0.0
        %255 = vmatprep.subr.mxu0 0.0
        %256 = vmatpush1.msra.mxu0 0.0
        %257 = vmatprep.subr.mxu0 0.0
        %258 = vmatpush1.msra.mxu0 0.0
        %259 = vmatprep.subr.mxu0 0.0
        %260 = vmatpush1.msra.mxu0 0.0
        %261 = vmatprep.subr.mxu0 0.0
        %262 = vmatpush1.msra.mxu0 0.0
        %263 = vmatprep.subr.mxu0 0.0
        %264 = vmatpush1.msra.mxu0 0.0
        %265 = vmatprep.subr.mxu0 0.0
        %266 = vmatpush1.msra.mxu0 0.0
        %267 = vmatprep.subr.mxu0 0.0
        %268 = vmatpush1.msra.mxu0 0.0
        %269 = vmatprep.subr.mxu0 0.0
        %270 = vmatpush1.msra.mxu0 0.0
        %271 = vmatprep.subr.mxu0 0.0
        %272 = vmatpush1.msra.mxu0 0.0
        %273 = vmatprep.subr.mxu0 0.0
        %274 = vmatpush1.msra.mxu0 0.0
        %275 = vmatprep.subr.mxu0 0.0
        %276 = vmatpush1.msra.mxu0 0.0
        %277 = vmatprep.subr.mxu0 0.0
        %278 = vmatpush1.msra.mxu0 0.0
        %279 = vmatprep.subr.mxu0 0.0
        %280 = vmatpush1.msra.mxu0 0.0
        %281 = vmatprep.subr.mxu0 0.0
        %282 = vmatpush1.msra.mxu0 0.0
        %283 = vmatprep.subr.mxu0 0.0
        %284 = vmatpush1.msra.mxu0 0.0
        %285 = vmatprep.subr.mxu0 0.0
        %286 = vmatpush1.msra.mxu0 0.0
        %287 = vmatprep.subr.mxu0 0.0
        %288 = vmatpush1.msra.mxu0 0.0
        %289 = vmatprep.subr.mxu0 0.0
        %290 = vmatpush1.msra.mxu0 0.0
        %291 = vmatprep.subr.mxu0 0.0
        %292 = vmatpush1.msra.mxu0 0.0
        %293 = vmatprep.subr.mxu0 0.0
        %294 = vmatpush1.msra.mxu0 0.0
        %295 = vmatprep.subr.mxu0 0.0
        %296 = vmatpush1.msra.mxu0 0.0
        %297 = vmatprep.subr.mxu0 0.0
        %298 = vmatpush1.msra.mxu0 0.0
        %299 = vmatprep.subr.mxu0 0.0
        %300 = vmatpush1.msra.mxu0 0.0
        %301 = vmatprep.subr.mxu0 0.0
        %302 = vmatpush1.msra.mxu0 0.0
        %303 = vmatprep.subr.mxu0 0.0
        %304 = vmatpush1.msra.mxu0 0.0
        %305 = vmatprep.subr.mxu0 0.0
        %306 = vmatpush1.msra.mxu0 0.0
        %307 = vmatprep.subr.mxu0 0.0
        %308 = vmatpush1.msra.mxu0 0.0
        %309 = vmatprep.subr.mxu0 0.0
        %310 = vmatpush1.msra.mxu0 0.0
        %311 = vmatprep.mubr.f32.mxu0 0.0
        %312 = vmatmul.mubr.f32.gmra.mrb[0].mxu0 %v224
        %v313 = vpop.f32.mrb[0].mxu0
        %v314 = vadd.f32 0.0, %v313
        %v315 = vpop.f32.mrb[0].mxu0
        %v316 = vadd.f32 0.0, %v315
        %317 = vmatprep.mubr.f32.mxu0 0.0
        %318 = vmatmul.mubr.f32.gmra.mrb[0].mxu0 %v227
        %v319 = vpop.f32.mrb[0].mxu0
        %v320 = vadd.f32 0.0, %v319
        %v321 = vpop.f32.mrb[0].mxu0
        %v322 = vadd.f32 0.0, %v321
        %323 = vmatprep.mubr.f32.mxu0 0.0
        %324 = vmatmul.mubr.f32.gmra.mrb[0].mxu0 %v230
        %v325 = vpop.f32.mrb[0].mxu0
        %v326 = vadd.f32 0.0, %v325
        %v327 = vpop.f32.mrb[0].mxu0
        %v328 = vadd.f32 0.0, %v327
        %329 = vmatprep.mubr.f32.mxu0 0.0
        %330 = vmatmul.mubr.f32.gmra.mrb[0].mxu0 %v233
        %v331 = vpop.f32.mrb[0].mxu0
        %v332 = vadd.f32 0.0, %v331
        %v333 = vpop.f32.mrb[0].mxu0
        %v334 = vadd.f32 0.0, %v333
        %335 = vmatprep.mubr.f32.mxu0 0.0
        %336 = vmatmul.mubr.f32.gmra.mrb[0].mxu0 %v236
        %v337 = vpop.f32.mrb[0].mxu0
        %v338 = vadd.f32 0.0, %v337
        %v339 = vpop.f32.mrb[0].mxu0
        %v340 = vadd.f32 0.0, %v339
        %341 = vmatprep.mubr.f32.mxu0 0.0
        %342 = vmatmul.mubr.f32.gmra.mrb[0].mxu0 %v239
        %v343 = vpop.f32.mrb[0].mxu0
        %v344 = vadd.f32 0.0, %v343
        %v345 = vpop.f32.mrb[0].mxu0
        %v346 = vadd.f32 0.0, %v345
        %347 = vmatprep.mubr.f32.mxu0 0.0
        %348 = vmatmul.mubr.f32.gmra.mrb[0].mxu0 %v242
        %v349 = vpop.f32.mrb[0].mxu0
        %v350 = vadd.f32 0.0, %v349
        %v351 = vpop.f32.mrb[0].mxu0
        %v352 = vadd.f32 0.0, %v351
        %353 = vmatprep.mubr.f32.mxu0 0.0
        %354 = vmatmul.mubr.f32.gmra.mrb[0].mxu0 %v245
        %v355 = vpop.f32.mrb[0].mxu0
        %v356 = vadd.f32 0.0, %v355
        %v357 = vpop.f32.mrb[0].mxu0
        %v358 = vadd.f32 0.0, %v357
        %359 = vdwg.mxu0
        %360 = vst [vmem:[#allocation2] sm:$0xff] %v314
        %361 = vst [vmem:[#allocation2 + $0x8] sm:$0xff] %v316
        %362 = vst [vmem:[#allocation2 + $0x10] sm:$0xff] %v320
        %363 = vst [vmem:[#allocation2 + $0x18] sm:$0xff] %v322
        %364 = vst [vmem:[#allocation2 + $0x20] sm:$0xff] %v326
        %365 = vst [vmem:[#allocation2 + $0x28] sm:$0xff] %v328
        %366 = vst [vmem:[#allocation2 + $0x30] sm:$0xff] %v332
        %367 = vst [vmem:[#allocation2 + $0x38] sm:$0xff] %v334
        %368 = vst [vmem:[#allocation2 + $0x40] sm:$0xff] %v338
        %369 = vst [vmem:[#allocation2 + $0x48] sm:$0xff] %v340
        %370 = vst [vmem:[#allocation2 + $0x50] sm:$0xff] %v344
        %371 = vst [vmem:[#allocation2 + $0x58] sm:$0xff] %v346
        %372 = vst [vmem:[#allocation2 + $0x60] sm:$0xff] %v350
        %373 = vst [vmem:[#allocation2 + $0x68] sm:$0xff] %v352
        %374 = vst [vmem:[#allocation2 + $0x70] sm:$0xff] %v356
        %375 = vst [vmem:[#allocation2 + $0x78] sm:$0xff] %v358
        %s376 = sld [smem:[#allocation3]]
        %v377 = vld [vmem:[%s2] sm:$0xff]
        %v378 = vld [vmem:[%s2 + $0x8] sm:$0xff]
        %v379 = vld [vmem:[%s2 + $0x10] sm:$0xff]
        %v380 = vld [vmem:[%s2 + $0x18] sm:$0xff]
        %v381 = vld [vmem:[%s2 + $0x20] sm:$0xff]
        %v382 = vld [vmem:[%s2 + $0x28] sm:$0xff]
        %v383 = vld [vmem:[%s2 + $0x30] sm:$0xff]
        %v384 = vld [vmem:[%s2 + $0x38] sm:$0xff]
        %v385 = vld [vmem:[%s2 + $0x40] sm:$0xff]
        %v386 = vld [vmem:[%s2 + $0x48] sm:$0xff]
        %v387 = vld [vmem:[%s2 + $0x50] sm:$0xff]
        %v388 = vld [vmem:[%s2 + $0x58] sm:$0xff]
        %v389 = vld [vmem:[%s2 + $0x60] sm:$0xff]
        %v390 = vld [vmem:[%s2 + $0x68] sm:$0xff]
        %v391 = vld [vmem:[%s2 + $0x70] sm:$0xff]
        %v392 = vld [vmem:[%s2 + $0x78] sm:$0xff]
        %v393 = vld [vmem:[%s2 + $0x80] sm:$0xff]
        %v394 = vld [vmem:[%s2 + $0x88] sm:$0xff]
        %v395 = vld [vmem:[%s2 + $0x90] sm:$0xff]
        %v396 = vld [vmem:[%s2 + $0x98] sm:$0xff]
        %v397 = vld [vmem:[%s2 + $0xa0] sm:$0xff]
        %v398 = vld [vmem:[%s2 + $0xa8] sm:$0xff]
        %v399 = vld [vmem:[%s2 + $0xb0] sm:$0xff]
        %v400 = vld [vmem:[%s2 + $0xb8] sm:$0xff]
        %v401 = vld [vmem:[%s2 + $0xc0] sm:$0xff]
        %v402 = vld [vmem:[%s2 + $0xc8] sm:$0xff]
        %v403 = vld [vmem:[%s2 + $0xd0] sm:$0xff]
        %v404 = vld [vmem:[%s2 + $0xd8] sm:$0xff]
        %v405 = vld [vmem:[%s2 + $0xe0] sm:$0xff]
        %v406 = vld [vmem:[%s2 + $0xe8] sm:$0xff]
        %v407 = vld [vmem:[%s2 + $0xf0] sm:$0xff]
        %v408 = vld [vmem:[%s2 + $0xf8] sm:$0xff]
        %s409 = smul.u32 0, 2
        %s410 = smul.addr %s409, 8
        %s411 = scalar_lea.vmem [#allocation2], %s410
        %v412 = vld [vmem:[%s411] sm:$0xff]
        %v413 = vld [vmem:[%s411 + $0x8] sm:$0xff]
        %v414 = vld [vmem:[%s411 + $0x10] sm:$0xff]
        %v415 = vld [vmem:[%s411 + $0x18] sm:$0xff]
        %v416 = vld [vmem:[%s411 + $0x20] sm:$0xff]
        %v417 = vld [vmem:[%s411 + $0x28] sm:$0xff]
        %v418 = vld [vmem:[%s411 + $0x30] sm:$0xff]
        %v419 = vld [vmem:[%s411 + $0x38] sm:$0xff]
        %v420 = vld [vmem:[%s411 + $0x40] sm:$0xff]
        %v421 = vld [vmem:[%s411 + $0x48] sm:$0xff]
        %v422 = vld [vmem:[%s411 + $0x50] sm:$0xff]
        %v423 = vld [vmem:[%s411 + $0x58] sm:$0xff]
        %v424 = vld [vmem:[%s411 + $0x60] sm:$0xff]
        %v425 = vld [vmem:[%s411 + $0x68] sm:$0xff]
        %v426 = vld [vmem:[%s411 + $0x70] sm:$0xff]
        %v427 = vld [vmem:[%s411 + $0x78] sm:$0xff]
        %v428 = vstv %s376
        %vm429 = vcmask 523264
        %v431 = vsel %vm429, %v377, 0
        %v434 = vsel %vm429, %v378, 0
        %v437 = vsel %vm429, %v379, 0
        %v440 = vsel %vm429, %v380, 0
        %v443 = vsel %vm429, %v381, 0
        %v446 = vsel %vm429, %v382, 0
        %v449 = vsel %vm429, %v383, 0
        %v452 = vsel %vm429, %v384, 0
        %v455 = vsel %vm429, %v385, 0
        %v458 = vsel %vm429, %v386, 0
        %v461 = vsel %vm429, %v387, 0
        %v464 = vsel %vm429, %v388, 0
        %v467 = vsel %vm429, %v389, 0
        %v470 = vsel %vm429, %v390, 0
        %v473 = vsel %vm429, %v391, 0
        %v476 = vsel %vm429, %v392, 0
        %v479 = vsel %vm429, %v393, 0
        %v482 = vsel %vm429, %v394, 0
        %v485 = vsel %vm429, %v395, 0
        %v488 = vsel %vm429, %v396, 0
        %v491 = vsel %vm429, %v397, 0
        %v494 = vsel %vm429, %v398, 0
        %v497 = vsel %vm429, %v399, 0
        %v500 = vsel %vm429, %v400, 0
        %v503 = vsel %vm429, %v401, 0
        %v506 = vsel %vm429, %v402, 0
        %v509 = vsel %vm429, %v403, 0
        %v512 = vsel %vm429, %v404, 0
        %v515 = vsel %vm429, %v405, 0
        %v518 = vsel %vm429, %v406, 0
        %v521 = vsel %vm429, %v407, 0
        %v524 = vsel %vm429, %v408, 0
        %526 = vmatprep.subr.mxu0 %v413
        %527 = vmatpush1.msra.mxu0 %v412
        %528 = vmatprep.subr.mxu0 %v415
        %529 = vmatpush1.msra.mxu0 %v414
        %530 = vmatprep.subr.mxu0 %v417
        %531 = vmatpush1.msra.mxu0 %v416
        %532 = vmatprep.subr.mxu0 %v419
        %533 = vmatpush1.msra.mxu0 %v418
        %534 = vmatprep.subr.mxu0 %v421
        %535 = vmatpush1.msra.mxu0 %v420
        %536 = vmatprep.subr.mxu0 %v423
        %537 = vmatpush1.msra.mxu0 %v422
        %538 = vmatprep.subr.mxu0 %v425
        %539 = vmatpush1.msra.mxu0 %v424
        %540 = vmatprep.subr.mxu0 %v427
        %541 = vmatpush1.msra.mxu0 %v426
        %542 = vmatprep.subr.mxu0 0.0
        %543 = vmatpush1.msra.mxu0 0.0
        %544 = vmatprep.subr.mxu0 0.0
        %545 = vmatpush1.msra.mxu0 0.0
        %546 = vmatprep.subr.mxu0 0.0
        %547 = vmatpush1.msra.mxu0 0.0
        %548 = vmatprep.subr.mxu0 0.0
        %549 = vmatpush1.msra.mxu0 0.0
        %550 = vmatprep.subr.mxu0 0.0
        %551 = vmatpush1.msra.mxu0 0.0
        %552 = vmatprep.subr.mxu0 0.0
        %553 = vmatpush1.msra.mxu0 0.0
        %554 = vmatprep.subr.mxu0 0.0
        %555 = vmatpush1.msra.mxu0 0.0
        %556 = vmatprep.subr.mxu0 0.0
        %557 = vmatpush1.msra.mxu0 0.0
        %558 = vmatprep.subr.mxu0 0.0
        %559 = vmatpush1.msra.mxu0 0.0
        %560 = vmatprep.subr.mxu0 0.0
        %561 = vmatpush1.msra.mxu0 0.0
        %562 = vmatprep.subr.mxu0 0.0
        %563 = vmatpush1.msra.mxu0 0.0
        %564 = vmatprep.subr.mxu0 0.0
        %565 = vmatpush1.msra.mxu0 0.0
        %566 = vmatprep.subr.mxu0 0.0
        %567 = vmatpush1.msra.mxu0 0.0
        %568 = vmatprep.subr.mxu0 0.0
        %569 = vmatpush1.msra.mxu0 0.0
        %570 = vmatprep.subr.mxu0 0.0
        %571 = vmatpush1.msra.mxu0 0.0
        %572 = vmatprep.subr.mxu0 0.0
        %573 = vmatpush1.msra.mxu0 0.0
        %574 = vmatprep.subr.mxu0 0.0
        %575 = vmatpush1.msra.mxu0 0.0
        %576 = vmatprep.subr.mxu0 0.0
        %577 = vmatpush1.msra.mxu0 0.0
        %578 = vmatprep.subr.mxu0 0.0
        %579 = vmatpush1.msra.mxu0 0.0
        %580 = vmatprep.subr.mxu0 0.0
        %581 = vmatpush1.msra.mxu0 0.0
        %582 = vmatprep.subr.mxu0 0.0
        %583 = vmatpush1.msra.mxu0 0.0
        %584 = vmatprep.subr.mxu0 0.0
        %585 = vmatpush1.msra.mxu0 0.0
        %586 = vmatprep.subr.mxu0 0.0
        %587 = vmatpush1.msra.mxu0 0.0
        %588 = vmatprep.subr.mxu0 0.0
        %589 = vmatpush1.msra.mxu0 0.0
        %590 = vmatprep.mubr.f32.mxu0 0.0
        %591 = vmatmul.mubr.f32.gmra.mrb[0].mxu0 %v431
        %v592 = vpop.f32.mrb[0].mxu0
        %v593 = vadd.f32 %v428, %v592
        %v594 = vpop.f32.mrb[0].mxu0
        %v595 = vadd.f32 %v428, %v594
        %596 = vmatprep.mubr.f32.mxu0 0.0
        %597 = vmatmul.mubr.f32.gmra.mrb[0].mxu0 %v434
        %v598 = vpop.f32.mrb[0].mxu0
        %v599 = vadd.f32 %v428, %v598
        %v600 = vpop.f32.mrb[0].mxu0
        %v601 = vadd.f32 %v428, %v600
        %602 = vmatprep.mubr.f32.mxu0 0.0
        %603 = vmatmul.mubr.f32.gmra.mrb[0].mxu0 %v437
        %v604 = vpop.f32.mrb[0].mxu0
        %v605 = vadd.f32 %v428, %v604
        %v606 = vpop.f32.mrb[0].mxu0
        %v607 = vadd.f32 %v428, %v606
        %608 = vmatprep.mubr.f32.mxu0 0.0
        %609 = vmatmul.mubr.f32.gmra.mrb[0].mxu0 %v440
        %v610 = vpop.f32.mrb[0].mxu0
        %v611 = vadd.f32 %v428, %v610
        %v612 = vpop.f32.mrb[0].mxu0
        %v613 = vadd.f32 %v428, %v612
        %614 = vmatprep.mubr.f32.mxu0 0.0
        %615 = vmatmul.mubr.f32.gmra.mrb[0].mxu0 %v443
        %v616 = vpop.f32.mrb[0].mxu0
        %v617 = vadd.f32 %v428, %v616
        %v618 = vpop.f32.mrb[0].mxu0
        %v619 = vadd.f32 %v428, %v618
        %620 = vmatprep.mubr.f32.mxu0 0.0
        %621 = vmatmul.mubr.f32.gmra.mrb[0].mxu0 %v446
        %v622 = vpop.f32.mrb[0].mxu0
        %v623 = vadd.f32 %v428, %v622
        %v624 = vpop.f32.mrb[0].mxu0
        %v625 = vadd.f32 %v428, %v624
        %626 = vmatprep.mubr.f32.mxu0 0.0
        %627 = vmatmul.mubr.f32.gmra.mrb[0].mxu0 %v449
        %v628 = vpop.f32.mrb[0].mxu0
        %v629 = vadd.f32 %v428, %v628
        %v630 = vpop.f32.mrb[0].mxu0
        %v631 = vadd.f32 %v428, %v630
        %632 = vmatprep.mubr.f32.mxu0 0.0
        %633 = vmatmul.mubr.f32.gmra.mrb[0].mxu0 %v452
        %v634 = vpop.f32.mrb[0].mxu0
        %v635 = vadd.f32 %v428, %v634
        %v636 = vpop.f32.mrb[0].mxu0
        %v637 = vadd.f32 %v428, %v636
        %638 = vmatprep.mubr.f32.mxu0 0.0
        %639 = vmatmul.mubr.f32.gmra.mrb[0].mxu0 %v455
        %v640 = vpop.f32.mrb[0].mxu0
        %v641 = vadd.f32 %v428, %v640
        %v642 = vpop.f32.mrb[0].mxu0
        %v643 = vadd.f32 %v428, %v642
        %644 = vmatprep.mubr.f32.mxu0 0.0
        %645 = vmatmul.mubr.f32.gmra.mrb[0].mxu0 %v458
        %v646 = vpop.f32.mrb[0].mxu0
        %v647 = vadd.f32 %v428, %v646
        %v648 = vpop.f32.mrb[0].mxu0
        %v649 = vadd.f32 %v428, %v648
        %650 = vmatprep.mubr.f32.mxu0 0.0
        %651 = vmatmul.mubr.f32.gmra.mrb[0].mxu0 %v461
        %v652 = vpop.f32.mrb[0].mxu0
        %v653 = vadd.f32 %v428, %v652
        %v654 = vpop.f32.mrb[0].mxu0
        %v655 = vadd.f32 %v428, %v654
        %656 = vmatprep.mubr.f32.mxu0 0.0
        %657 = vmatmul.mubr.f32.gmra.mrb[0].mxu0 %v464
        %v658 = vpop.f32.mrb[0].mxu0
        %v659 = vadd.f32 %v428, %v658
        %v660 = vpop.f32.mrb[0].mxu0
        %v661 = vadd.f32 %v428, %v660
        %662 = vmatprep.mubr.f32.mxu0 0.0
        %663 = vmatmul.mubr.f32.gmra.mrb[0].mxu0 %v467
        %v664 = vpop.f32.mrb[0].mxu0
        %v665 = vadd.f32 %v428, %v664
        %v666 = vpop.f32.mrb[0].mxu0
        %v667 = vadd.f32 %v428, %v666
        %668 = vmatprep.mubr.f32.mxu0 0.0
        %669 = vmatmul.mubr.f32.gmra.mrb[0].mxu0 %v470
        %v670 = vpop.f32.mrb[0].mxu0
        %v671 = vadd.f32 %v428, %v670
        %v672 = vpop.f32.mrb[0].mxu0
        %v673 = vadd.f32 %v428, %v672
        %674 = vmatprep.mubr.f32.mxu0 0.0
        %675 = vmatmul.mubr.f32.gmra.mrb[0].mxu0 %v473
        %v676 = vpop.f32.mrb[0].mxu0
        %v677 = vadd.f32 %v428, %v676
        %v678 = vpop.f32.mrb[0].mxu0
        %v679 = vadd.f32 %v428, %v678
        %680 = vmatprep.mubr.f32.mxu0 0.0
        %681 = vmatmul.mubr.f32.gmra.mrb[0].mxu0 %v476
        %v682 = vpop.f32.mrb[0].mxu0
        %v683 = vadd.f32 %v428, %v682
        %v684 = vpop.f32.mrb[0].mxu0
        %v685 = vadd.f32 %v428, %v684
        %686 = vmatprep.mubr.f32.mxu0 0.0
        %687 = vmatmul.mubr.f32.gmra.mrb[0].mxu0 %v479
        %v688 = vpop.f32.mrb[0].mxu0
        %v689 = vadd.f32 %v428, %v688
        %v690 = vpop.f32.mrb[0].mxu0
        %v691 = vadd.f32 %v428, %v690
        %692 = vmatprep.mubr.f32.mxu0 0.0
        %693 = vmatmul.mubr.f32.gmra.mrb[0].mxu0 %v482
        %v694 = vpop.f32.mrb[0].mxu0
        %v695 = vadd.f32 %v428, %v694
        %v696 = vpop.f32.mrb[0].mxu0
        %v697 = vadd.f32 %v428, %v696
        %698 = vmatprep.mubr.f32.mxu0 0.0
        %699 = vmatmul.mubr.f32.gmra.mrb[0].mxu0 %v485
        %v700 = vpop.f32.mrb[0].mxu0
        %v701 = vadd.f32 %v428, %v700
        %v702 = vpop.f32.mrb[0].mxu0
        %v703 = vadd.f32 %v428, %v702
        %704 = vmatprep.mubr.f32.mxu0 0.0
        %705 = vmatmul.mubr.f32.gmra.mrb[0].mxu0 %v488
        %v706 = vpop.f32.mrb[0].mxu0
        %v707 = vadd.f32 %v428, %v706
        %v708 = vpop.f32.mrb[0].mxu0
        %v709 = vadd.f32 %v428, %v708
        %710 = vmatprep.mubr.f32.mxu0 0.0
        %711 = vmatmul.mubr.f32.gmra.mrb[0].mxu0 %v491
        %v712 = vpop.f32.mrb[0].mxu0
        %v713 = vadd.f32 %v428, %v712
        %v714 = vpop.f32.mrb[0].mxu0
        %v715 = vadd.f32 %v428, %v714
        %716 = vmatprep.mubr.f32.mxu0 0.0
        %717 = vmatmul.mubr.f32.gmra.mrb[0].mxu0 %v494
        %v718 = vpop.f32.mrb[0].mxu0
        %v719 = vadd.f32 %v428, %v718
        %v720 = vpop.f32.mrb[0].mxu0
        %v721 = vadd.f32 %v428, %v720
        %722 = vmatprep.mubr.f32.mxu0 0.0
        %723 = vmatmul.mubr.f32.gmra.mrb[0].mxu0 %v497
        %v724 = vpop.f32.mrb[0].mxu0
        %v725 = vadd.f32 %v428, %v724
        %v726 = vpop.f32.mrb[0].mxu0
        %v727 = vadd.f32 %v428, %v726
        %728 = vmatprep.mubr.f32.mxu0 0.0
        %729 = vmatmul.mubr.f32.gmra.mrb[0].mxu0 %v500
        %v730 = vpop.f32.mrb[0].mxu0
        %v731 = vadd.f32 %v428, %v730
        %v732 = vpop.f32.mrb[0].mxu0
        %v733 = vadd.f32 %v428, %v732
        %734 = vmatprep.mubr.f32.mxu0 0.0
        %735 = vmatmul.mubr.f32.gmra.mrb[0].mxu0 %v503
        %v736 = vpop.f32.mrb[0].mxu0
        %v737 = vadd.f32 %v428, %v736
        %v738 = vpop.f32.mrb[0].mxu0
        %v739 = vadd.f32 %v428, %v738
        %740 = vmatprep.mubr.f32.mxu0 0.0
        %741 = vmatmul.mubr.f32.gmra.mrb[0].mxu0 %v506
        %v742 = vpop.f32.mrb[0].mxu0
        %v743 = vadd.f32 %v428, %v742
        %v744 = vpop.f32.mrb[0].mxu0
        %v745 = vadd.f32 %v428, %v744
        %746 = vmatprep.mubr.f32.mxu0 0.0
        %747 = vmatmul.mubr.f32.gmra.mrb[0].mxu0 %v509
        %v748 = vpop.f32.mrb[0].mxu0
        %v749 = vadd.f32 %v428, %v748
        %v750 = vpop.f32.mrb[0].mxu0
        %v751 = vadd.f32 %v428, %v750
        %752 = vmatprep.mubr.f32.mxu0 0.0
        %753 = vmatmul.mubr.f32.gmra.mrb[0].mxu0 %v512
        %v754 = vpop.f32.mrb[0].mxu0
        %v755 = vadd.f32 %v428, %v754
        %v756 = vpop.f32.mrb[0].mxu0
        %v757 = vadd.f32 %v428, %v756
        %758 = vmatprep.mubr.f32.mxu0 0.0
        %759 = vmatmul.mubr.f32.gmra.mrb[0].mxu0 %v515
        %v760 = vpop.f32.mrb[0].mxu0
        %v761 = vadd.f32 %v428, %v760
        %v762 = vpop.f32.mrb[0].mxu0
        %v763 = vadd.f32 %v428, %v762
        %764 = vmatprep.mubr.f32.mxu0 0.0
        %765 = vmatmul.mubr.f32.gmra.mrb[0].mxu0 %v518
        %v766 = vpop.f32.mrb[0].mxu0
        %v767 = vadd.f32 %v428, %v766
        %v768 = vpop.f32.mrb[0].mxu0
        %v769 = vadd.f32 %v428, %v768
        %770 = vmatprep.mubr.f32.mxu0 0.0
        %771 = vmatmul.mubr.f32.gmra.mrb[0].mxu0 %v521
        %v772 = vpop.f32.mrb[0].mxu0
        %v773 = vadd.f32 %v428, %v772
        %v774 = vpop.f32.mrb[0].mxu0
        %v775 = vadd.f32 %v428, %v774
        %776 = vmatprep.mubr.f32.mxu0 0.0
        %777 = vmatmul.mubr.f32.gmra.mrb[0].mxu0 %v524
        %v778 = vpop.f32.mrb[0].mxu0
        %v779 = vadd.f32 %v428, %v778
        %v780 = vpop.f32.mrb[0].mxu0
        %v781 = vadd.f32 %v428, %v780
        %782 = vdwg.mxu0
        %783 = vst [vmem:[%s204] sm:$0xff] %v593
        %784 = vst [vmem:[%s204 + $0x8] sm:$0xff] %v595
        %785 = vst [vmem:[%s204 + $0x10] sm:$0xff] %v599
        %786 = vst [vmem:[%s204 + $0x18] sm:$0xff] %v601
        %787 = vst [vmem:[%s204 + $0x20] sm:$0xff] %v605
        %788 = vst [vmem:[%s204 + $0x28] sm:$0xff] %v607
        %789 = vst [vmem:[%s204 + $0x30] sm:$0xff] %v611
        %790 = vst [vmem:[%s204 + $0x38] sm:$0xff] %v613
        %791 = vst [vmem:[%s204 + $0x40] sm:$0xff] %v617
        %792 = vst [vmem:[%s204 + $0x48] sm:$0xff] %v619
        %793 = vst [vmem:[%s204 + $0x50] sm:$0xff] %v623
        %794 = vst [vmem:[%s204 + $0x58] sm:$0xff] %v625
        %795 = vst [vmem:[%s204 + $0x60] sm:$0xff] %v629
        %796 = vst [vmem:[%s204 + $0x68] sm:$0xff] %v631
        %797 = vst [vmem:[%s204 + $0x70] sm:$0xff] %v635
        %798 = vst [vmem:[%s204 + $0x78] sm:$0xff] %v637
        %799 = vst [vmem:[%s204 + $0x80] sm:$0xff] %v641
        %800 = vst [vmem:[%s204 + $0x88] sm:$0xff] %v643
        %801 = vst [vmem:[%s204 + $0x90] sm:$0xff] %v647
        %802 = vst [vmem:[%s204 + $0x98] sm:$0xff] %v649
        %803 = vst [vmem:[%s204 + $0xa0] sm:$0xff] %v653
        %804 = vst [vmem:[%s204 + $0xa8] sm:$0xff] %v655
        %805 = vst [vmem:[%s204 + $0xb0] sm:$0xff] %v659
        %806 = vst [vmem:[%s204 + $0xb8] sm:$0xff] %v661
        %807 = vst [vmem:[%s204 + $0xc0] sm:$0xff] %v665
        %808 = vst [vmem:[%s204 + $0xc8] sm:$0xff] %v667
        %809 = vst [vmem:[%s204 + $0xd0] sm:$0xff] %v671
        %810 = vst [vmem:[%s204 + $0xd8] sm:$0xff] %v673
        %811 = vst [vmem:[%s204 + $0xe0] sm:$0xff] %v677
        %812 = vst [vmem:[%s204 + $0xe8] sm:$0xff] %v679
        %813 = vst [vmem:[%s204 + $0xf0] sm:$0xff] %v683
        %814 = vst [vmem:[%s204 + $0xf8] sm:$0xff] %v685
        %815 = vst [vmem:[%s204 + $0x100] sm:$0xff] %v689
        %816 = vst [vmem:[%s204 + $0x108] sm:$0xff] %v691
        %817 = vst [vmem:[%s204 + $0x110] sm:$0xff] %v695
        %818 = vst [vmem:[%s204 + $0x118] sm:$0xff] %v697
        %819 = vst [vmem:[%s204 + $0x120] sm:$0xff] %v701
        %820 = vst [vmem:[%s204 + $0x128] sm:$0xff] %v703
        %821 = vst [vmem:[%s204 + $0x130] sm:$0xff] %v707
        %822 = vst [vmem:[%s204 + $0x138] sm:$0xff] %v709
        %823 = vst [vmem:[%s204 + $0x140] sm:$0xff] %v713
        %824 = vst [vmem:[%s204 + $0x148] sm:$0xff] %v715
        %825 = vst [vmem:[%s204 + $0x150] sm:$0xff] %v719
        %826 = vst [vmem:[%s204 + $0x158] sm:$0xff] %v721
        %827 = vst [vmem:[%s204 + $0x160] sm:$0xff] %v725
        %828 = vst [vmem:[%s204 + $0x168] sm:$0xff] %v727
        %829 = vst [vmem:[%s204 + $0x170] sm:$0xff] %v731
        %830 = vst [vmem:[%s204 + $0x178] sm:$0xff] %v733
        %831 = vst [vmem:[%s204 + $0x180] sm:$0xff] %v737
        %832 = vst [vmem:[%s204 + $0x188] sm:$0xff] %v739
        %833 = vst [vmem:[%s204 + $0x190] sm:$0xff] %v743
        %834 = vst [vmem:[%s204 + $0x198] sm:$0xff] %v745
        %835 = vst [vmem:[%s204 + $0x1a0] sm:$0xff] %v749
        %836 = vst [vmem:[%s204 + $0x1a8] sm:$0xff] %v751
        %837 = vst [vmem:[%s204 + $0x1b0] sm:$0xff] %v755
        %838 = vst [vmem:[%s204 + $0x1b8] sm:$0xff] %v757
        %839 = vst [vmem:[%s204 + $0x1c0] sm:$0xff] %v761
        %840 = vst [vmem:[%s204 + $0x1c8] sm:$0xff] %v763
        %841 = vst [vmem:[%s204 + $0x1d0] sm:$0xff] %v767
        %842 = vst [vmem:[%s204 + $0x1d8] sm:$0xff] %v769
        %843 = vst [vmem:[%s204 + $0x1e0] sm:$0xff] %v773
        %844 = vst [vmem:[%s204 + $0x1e8] sm:$0xff] %v775
        %845 = vst [vmem:[%s204 + $0x1f0] sm:$0xff] %v779
        %846 = vst [vmem:[%s204 + $0x1f8] sm:$0xff] %v781
        %s847 = sand.u32 %s116, 1
        %s848 = scalar_lea.sflag [#allocation4], %s847
        %s849 = sand.u32 %s116, 1
        %s850 = smul.addr %s849, 512
        %s851 = scalar_lea.vmem [#allocation6], %s850
        // Predicated region
        $region41: #{tpu_custom_call.1} parent=35 // pred_check
          %p852 = pneg %p126
        $region42: #{tpu_custom_call.1} parent=35 // pred_check_branch
          %854 = sbr.rel (%p852) target = $region44
        $region43: #{tpu_custom_call.1} parent=35 // pred_region
          %s856 = ssub.s32 8192, 8192
          %857 = vsyncadd %s848, %s856
          %s858 = smul.addr %s19, 64
          %s859 = smul.addr %s858, 128
          %s860 = scalar_lea.hbm %s4, %s859
          %s861 = sshll.u32 %s851, 4
          %s862 = int_to_ptr.vmem [resolvable:$true] %s861
          %867 = dma.vmem_to_hbm [thread:$0]  %s862, 8192, %s860, %s848, 256, 256, 16
        $region44: #{tpu_custom_call.1} parent=35 // pred_fallthru
          _
      $region36: #{tpu_custom_call.1} parent=5 // pred_fallthru
        _
      %p868 = scmp.le.s32.totalorder 2, %s14
      // Predicated region
      $region45: #{tpu_custom_call.1} parent=5 // pred_check
        %p869 = pneg %p868
      $region46: #{tpu_custom_call.1} parent=5 // pred_check_branch
        %871 = sbr.rel (%p869) target = $region48
      $region47: #{tpu_custom_call.1} parent=5 // pred_region
        %s872 = ssub.s32 %s14, 2
        // Predicated region
        $region49: #{tpu_custom_call.1} parent=47 // pred_check
          %p873 = pneg %p132
        $region50: #{tpu_custom_call.1} parent=47 // pred_check_branch
          %875 = sbr.rel (%p873) target = $region52
        $region51: #{tpu_custom_call.1} parent=47 // pred_region
          %s876 = sand.u32 %s117, 1
          %s877 = scalar_lea.sflag [#allocation4], %s876
          %s878 = sand.u32 %s117, 1
          %s879 = smul.addr %s878, 512
          %s880 = scalar_lea.vmem [#allocation6], %s879
          %881 = dma.done %s877, 8192
        $region52: #{tpu_custom_call.1} parent=47 // pred_fallthru
          _
      $region48: #{tpu_custom_call.1} parent=5 // pred_fallthru
        _
    $region6: #{tpu_custom_call.1} parent=1 // loop_footer
      %s18 = sadd.s32 1, %s14
    $region7: #{tpu_custom_call.1} parent=1 // loop_footer_branch
      %13 = sbr.rel target = $region3
    $region8: #{tpu_custom_call.1} parent=1 // loop_exit
      _
    %882 = vsyncpa [#allocation4], 1
    %s883 = scalar_lea.sflag [#allocation4], 1
    %884 = vsyncpa %s883, 1
    %885 = vsyncpa [#allocation5], 1
    %s886 = scalar_lea.sflag [#allocation5], 1
    %887 = vsyncpa %s886, 1

</llo_original>
